<compile_context>
chip_gen: v7x
topology: tpu7x:2x2x1
jax: 0.10.0
libtpu: 0.0.40
codegen_flags: <defaults>
</compile_context>

<pallas_src>
import functools

import jax
import jax.numpy as jnp
from jax import lax
from jax.experimental import pallas as pl
from jax.experimental.pallas import tpu as pltpu


def _cdiv(a, b):
    return -(-a // b)


def _vmem_capacity_bytes():
    """Best-effort physical VMEM per core; conservative (v7x) fallback."""
    try:
        info = pltpu.get_tpu_info()
        v = getattr(info, "vmem_capacity_bytes", None)
        if v:
            return int(v)
    except Exception:
        pass
    return 64 << 20


def _tensorcores_per_device():
    """Best-effort TensorCores per jax.Device: 2 on megacore (v4/v5p) and v7x."""
    try:
        kind = jax.devices()[0].device_kind.lower()
    except Exception:
        return 1
    if any(tag in kind for tag in ("v4", "v5p", "v7", "7x")):
        return 2
    return 1


def _best_cols(nelem):
    """Pick a lane-dense column count C that divides nelem (zero-copy reshape)."""
    if nelem <= 0:
        return 1
    for c in (512, 384, 256, 128):
        if nelem % c == 0:
            return c
    for c in range(min(nelem, 128), 0, -1):
        if nelem % c == 0:
            return c
    return 1


def _triplet_dist_kernel(p_ref, a_ref, n_ref, out_ref, *,
                         block_rows, cols, strip_rows, fold_rows,
                         blocks_per_chunk, last_block, tail_rows, needs_mask):
    """Accumulate sum over rows of (a-p)^2 - (a-n)^2 into a (fold_rows, C) f32
    accumulator that stays VMEM-resident across the inner (reduction) grid axis."""
    c = pl.program_id(0)   # chunk (parallel axis; one per TensorCore when > 1)
    i = pl.program_id(1)   # row-block within the chunk (reduction axis, last)

    @pl.when(i == 0)
    def _init():
        out_ref[...] = jnp.zeros_like(out_ref)

    n_strips = block_rows // strip_rows

    def _accumulate(masked):
        def strip_body(s, acc):
            r0 = s * strip_rows
            a = a_ref[pl.ds(r0, strip_rows), :].astype(jnp.float32)
            p = p_ref[pl.ds(r0, strip_rows), :].astype(jnp.float32)
            n = n_ref[pl.ds(r0, strip_rows), :].astype(jnp.float32)
            dp = a - p
            dn = a - n
            e = dp * dp - dn * dn
            if masked:
                # Rows >= tail_rows in the last (partial) block are DMA padding
                # with unspecified contents -> select (not multiply) them to 0.
                row = lax.broadcasted_iota(jnp.int32, (strip_rows, cols), 0) + r0
                e = jnp.where(row < tail_rows, e, 0.0)
            # Fold the strip's rows onto `fold_rows` sublanes with plain vreg adds.
            return acc + e.reshape(strip_rows // fold_rows, fold_rows, cols).sum(axis=0)

        acc = lax.fori_loop(0, n_strips, strip_body,
                            jnp.zeros((fold_rows, cols), jnp.float32),
                            unroll=True)
        out_ref[0] += acc

    if needs_mask:
        b = c * blocks_per_chunk + i

        @pl.when(b == last_block)
        def _partial_block():
            _accumulate(masked=True)

        @pl.when(b != last_block)
        def _full_block():
            _accumulate(masked=False)
    else:
        _accumulate(masked=False)


def _triplet_dist_sum(p2, a2, n2):
    """sum_{all elements} (a-p)^2 - (a-n)^2 for a 2-D lane-dense (R, C) view."""
    R, C = a2.shape
    itemsize = jnp.dtype(a2.dtype).itemsize
    row_bytes = C * itemsize
    nelem = R * C

    vmem_cap = _vmem_capacity_bytes()
    # Native-dtype bytes per input block: ~1/14 of VMEM (6 pipelined buffers +
    # headroom), capped at 8 MiB (v5e/v6e 128 MiB; v7x 64 MiB -> ~4.5 MiB).
    target_block_bytes = max(1 << 16, min(vmem_cap // 14, 8 << 20))

    if R < 8:
        # Tiny inputs: a single full-array block (full dims are always legal).
        block_rows = R
        strip_rows = R
        num_blocks = 1
        n_chunks = 1
    else:
        # Strip: multiple of 8 rows, ~128K elements (f32 temps stay ~0.5 MiB).
        strip_rows = max(8, min((131072 // C) // 8 * 8, (R // 8) * 8))
        target_rows = max(strip_rows, target_block_bytes // row_bytes)
        block_rows = max(strip_rows,
                         min(target_rows // strip_rows, R // strip_rows) * strip_rows)
        num_blocks = _cdiv(R, block_rows)
        n_chunks = _tensorcores_per_device()
        if n_chunks > 1:
            if num_blocks < n_chunks:
                n_chunks = 1
            elif num_blocks % n_chunks != 0:
                # Rebalance block_rows so the block count splits evenly over chunks.
                nb_target = _cdiv(num_blocks, n_chunks) * n_chunks
                br = _cdiv(_cdiv(R, nb_target), strip_rows) * strip_rows
                br = max(strip_rows, min(br, (R // strip_rows) * strip_rows))
                nb = _cdiv(R, br)
                if nb % n_chunks == 0:
                    block_rows, num_blocks = br, nb
                else:
                    n_chunks = 1

    blocks_per_chunk = num_blocks // n_chunks
    needs_mask = (R % block_rows) != 0
    tail_rows = R - (num_blocks - 1) * block_rows        # valid rows in last block
    fold_rows = 8 if strip_rows % 8 == 0 else 1

    block_bytes = block_rows * row_bytes
    # 3 inputs x 2 pipeline buffers in native dtype + headroom for strip temps,
    # accumulators and Mosaic internals; never above (physical - 8 MiB).
    vmem_limit = int(max(16 << 20,
                         min(vmem_cap - (8 << 20), 6 * block_bytes + (8 << 20))))

    kernel = functools.partial(
        _triplet_dist_kernel,
        block_rows=block_rows, cols=C, strip_rows=strip_rows, fold_rows=fold_rows,
        blocks_per_chunk=blocks_per_chunk, last_block=num_blocks - 1,
        tail_rows=tail_rows, needs_mask=needs_mask)

    in_spec = pl.BlockSpec((block_rows, C),
                           lambda c, i, _bpc=blocks_per_chunk: (c * _bpc + i, 0))
    out_spec = pl.BlockSpec((1, fold_rows, C), lambda c, i: (c, 0, 0))

    cost = pl.CostEstimate(
        flops=6 * nelem,
        transcendentals=0,
        bytes_accessed=3 * nelem * itemsize + n_chunks * fold_rows * C * 4)

    partials = pl.pallas_call(
        kernel,
        out_shape=jax.ShapeDtypeStruct((n_chunks, fold_rows, C), jnp.float32),
        grid_spec=pltpu.PrefetchScalarGridSpec(
            num_scalar_prefetch=0,
            grid=(n_chunks, blocks_per_chunk),
            in_specs=[in_spec, in_spec, in_spec],
            out_specs=out_spec),
        compiler_params=pltpu.CompilerParams(
            dimension_semantics=("parallel", "arbitrary"),
            vmem_limit_bytes=vmem_limit),
        cost_estimate=cost,
    )(p2, a2, n2)

    # Tiny cross-lane reduce of the (n_chunks, fold_rows, C) partials in plain JAX.
    return jnp.sum(partials)


def triplet_loss(positive, anchor, negative, *, margin=0.2,
                 metric="l2", weighted=False):
    """Pallas TPU implementation of Triplet_Loss(metric='l2', weighted=False)."""
    if metric.lower() not in ("l2", "euclidean", "l_2"):
        raise NotImplementedError("Only the 'l2' metric branch is implemented.")
    if weighted:
        raise NotImplementedError("weighted=True re-weighting is not kernelized.")
    assert positive.shape == anchor.shape == negative.shape
    assert positive.dtype == anchor.dtype == negative.dtype

    nelem = int(anchor.size)
    C = _best_cols(nelem)
    R = nelem // C
    view = (R, C)   # zero-copy row-major reshape; no pad, no slice of the inputs

    total = _triplet_dist_sum(positive.reshape(view),
                              anchor.reshape(view),
                              negative.reshape(view))
    return total / jnp.float32(nelem) + jnp.float32(margin)


def _triplet_loss_ref(positive, anchor, negative, margin=0.2):
    dist = (anchor - positive) ** 2 - (anchor - negative) ** 2 + margin
    return jnp.sum(dist) / dist.size


if __name__ == "__main__":
    key = jax.random.PRNGKey(0)
    kp, ka, kn = jax.random.split(key, 3)

    def check(shape, dtype=jnp.float32, atol=1e-5):
        p = jax.random.normal(kp, shape, dtype=jnp.float32).astype(dtype)
        a = jax.random.normal(ka, shape, dtype=jnp.float32).astype(dtype)
        n = jax.random.normal(kn, shape, dtype=jnp.float32).astype(dtype)
        loss = jax.block_until_ready(triplet_loss(p, a, n, margin=0.2))
        ref = _triplet_loss_ref(p.astype(jnp.float32), a.astype(jnp.float32),
                                n.astype(jnp.float32), margin=0.2)
        assert loss.shape == ()  # scalar loss, matches PyTorch 0-d tensor
        assert jnp.allclose(loss, ref, rtol=1e-4, atol=atol), (shape, dtype, loss, ref)

    # NCHW conv-feature triplet (128-aligned element count -> lane-dense view).
    check((2, 4, 16, 16))
    # Odd, non-128-aligned element count (single tiny block, no padding anywhere).
    check((3, 5, 7))
    # Non-aligned count exercising multi-block grid + masked partial last block.
    check((2, 3, 40, 40))
    # Narrow dtype read at native width from HBM, accumulated in f32.
    check((2, 4, 16, 16), dtype=jnp.bfloat16, atol=5e-3)

    print("KERNEL_OK")
</pallas_src>

<mosaic_0001>
module attributes {stable_mosaic.version = 11 : i64} {
  func.func @_triplet_dist_kernel(%arg0: i32, %arg1: i32, %arg2: memref<4x512xf32, #tpu.memory_space<vmem>>, %arg3: memref<4x512xf32, #tpu.memory_space<vmem>>, %arg4: memref<4x512xf32, #tpu.memory_space<vmem>>, %arg5: memref<1x1x512xf32, #tpu.memory_space<vmem>>) attributes {dimension_semantics = [#tpu.dimension_semantics<parallel>, #tpu.dimension_semantics<arbitrary>], iteration_bounds = array<i64: 1, 1>, scalar_prefetch = 0 : i64, scratch_operands = 0 : i64, tpu.core_type = #tpu.core_type<tc>, window_params = [{transform_indices = @transform_0, window_bounds = array<i64: 4, 512>}, {transform_indices = @transform_1, window_bounds = array<i64: 4, 512>}, {transform_indices = @transform_2, window_bounds = array<i64: 4, 512>}, {transform_indices = @transform_3, window_bounds = array<i64: 1, 1, 512>}]} {
    %c0_i32 = arith.constant 0 : i32
    %0 = arith.cmpi eq, %arg1, %c0_i32 : i32
    %1 = arith.extui %0 : i1 to i32
    %c0_i32_0 = arith.constant 0 : i32
    %2 = arith.cmpi ne, %1, %c0_i32_0 : i32
    scf.if %2 {
      %cst_11 = arith.constant 0.000000e+00 : f32
      %25 = vector.broadcast %cst_11 : f32 to vector<1x1x512xf32>
      %c0_12 = arith.constant 0 : index
      %c0_13 = arith.constant 0 : index
      %c0_14 = arith.constant 0 : index
      %26 = vector.load %arg5[%c0_12, %c0_13, %c0_14] : memref<1x1x512xf32, #tpu.memory_space<vmem>>, vector<1x1x512xf32>
      tpu.vector_store %arg5[%c0_12, %c0_13, %c0_14], %25 {strides = array<i32>} : memref<1x1x512xf32, #tpu.memory_space<vmem>>, vector<1x1x512xf32>,
    } else {
    }
    %cst = arith.constant 0.000000e+00 : f32
    %3 = vector.broadcast %cst : f32 to vector<1x512xf32>
    %c0_i32_1 = arith.constant 0 : i32
    %c4_i32 = arith.constant 4 : i32
    %4 = arith.muli %c0_i32_1, %c4_i32 : i32
    %5 = arith.index_cast %4 : i32 to index
    %c0 = arith.constant 0 : index
    %6 = vector.load %arg3[%5, %c0] : memref<4x512xf32, #tpu.memory_space<vmem>>, vector<4x512xf32>
    %7 = arith.index_cast %4 : i32 to index
    %c0_2 = arith.constant 0 : index
    %8 = vector.load %arg2[%7, %c0_2] : memref<4x512xf32, #tpu.memory_space<vmem>>, vector<4x512xf32>
    %9 = arith.index_cast %4 : i32 to index
    %c0_3 = arith.constant 0 : index
    %10 = vector.load %arg4[%9, %c0_3] : memref<4x512xf32, #tpu.memory_space<vmem>>, vector<4x512xf32>
    %11 = arith.subf %6, %8 : vector<4x512xf32>
    %12 = arith.subf %6, %10 : vector<4x512xf32>
    %13 = arith.mulf %11, %11 : vector<4x512xf32>
    %14 = arith.mulf %12, %12 : vector<4x512xf32>
    %15 = arith.subf %13, %14 : vector<4x512xf32>
    %16 = vector.shape_cast %15 : vector<4x512xf32> to vector<4x1x512xf32>
    %cst_4 = arith.constant dense<0.000000e+00> : vector<1x512xf32>
    %17 = vector.multi_reduction <add>, %16, %cst_4 [0] : vector<4x1x512xf32> to vector<1x512xf32>
    %18 = arith.addf %3, %17 : vector<1x512xf32>
    %c1_i32 = arith.constant 1 : i32
    %c0_5 = arith.constant 0 : index
    %c0_6 = arith.constant 0 : index
    %c0_7 = arith.constant 0 : index
    %19 = vector.load %arg5[%c0_5, %c0_6, %c0_7] : memref<1x1x512xf32, #tpu.memory_space<vmem>>, vector<1x1x512xf32>
    %20 = vector.shape_cast %19 : vector<1x1x512xf32> to vector<1x512xf32>
    %21 = arith.addf %20, %18 : vector<1x512xf32>
    %c0_8 = arith.constant 0 : index
    %c0_9 = arith.constant 0 : index
    %c0_10 = arith.constant 0 : index
    %22 = vector.load %arg5[%c0_8, %c0_9, %c0_10] : memref<1x1x512xf32, #tpu.memory_space<vmem>>, vector<1x1x512xf32>
    %23 = vector.shape_cast %22 : vector<1x1x512xf32> to vector<1x512xf32>
    %24 = vector.shape_cast %21 : vector<1x512xf32> to vector<1x1x512xf32>
    tpu.vector_store %arg5[%c0_8, %c0_9, %c0_10], %24 {strides = array<i32>} : memref<1x1x512xf32, #tpu.memory_space<vmem>>, vector<1x1x512xf32>,
    return
  }
  func.func @transform_0(%arg0: i32, %arg1: i32) -> (i32, i32) {
    %c1_i32 = arith.constant 1 : i32
    %0 = arith.muli %arg0, %c1_i32 : i32
    %1 = arith.addi %0, %arg1 : i32
    %c0_i32 = arith.constant 0 : i32
    %c0_i32_0 = arith.constant 0 : i32
    return %1, %c0_i32 : i32, i32
  }
  func.func @transform_1(%arg0: i32, %arg1: i32) -> (i32, i32) {
    %c1_i32 = arith.constant 1 : i32
    %0 = arith.muli %arg0, %c1_i32 : i32
    %1 = arith.addi %0, %arg1 : i32
    %c0_i32 = arith.constant 0 : i32
    %c0_i32_0 = arith.constant 0 : i32
    return %1, %c0_i32 : i32, i32
  }
  func.func @transform_2(%arg0: i32, %arg1: i32) -> (i32, i32) {
    %c1_i32 = arith.constant 1 : i32
    %0 = arith.muli %arg0, %c1_i32 : i32
    %1 = arith.addi %0, %arg1 : i32
    %c0_i32 = arith.constant 0 : i32
    %c0_i32_0 = arith.constant 0 : i32
    return %1, %c0_i32 : i32, i32
  }
  func.func @transform_3(%arg0: i32, %arg1: i32) -> (i32, i32, i32) {
    %c0_i32 = arith.constant 0 : i32
    %c0_i32_0 = arith.constant 0 : i32
    %c0_i32_1 = arith.constant 0 : i32
    return %arg0, %c0_i32, %c0_i32_0 : i32, i32, i32
  }
}

</mosaic_0001>

<llo_original>
// kernel: tpu_custom_call.1
$region0: #{tpu_custom_call.1}
  #allocation0 [shape = 'u32[]', space=smem, size = 0x4, offset = 0x4, fixed_abs, tag = 'smem constant byte address 0x4 - core index']
  #allocation1 [shape = 'u32[144,128]{1,0:T(1,128)}', space=vmem, size = 0x12000, scoped, tag = 'internal scratch']
  %s0 = inlined_call_operand.hbm [shape: f32[4,512], index: 0, kind: input, shape index: {}]
  %s1 = inlined_call_operand.hbm [shape: f32[4,512], index: 1, kind: input, shape index: {}]
  %s2 = inlined_call_operand.hbm [shape: f32[4,512], index: 2, kind: input, shape index: {}]
  %s3 = inlined_call_operand.hbm [shape: f32[1,1,512], index: 3, kind: output, shape index: {}]
  %s4 = sld [smem:[#allocation0]]
  $region38: #{tpu_custom_call.1} parent=0
    _
  %s6 = ssub.s32 1, %s4
  %s7 = scalar_select 0, %s6, %s4
  $region1: #{tpu_custom_call.1} parent=0
    #allocation2 [shape = 'u8[8192]{0}', space=vmem, size = 0x2000, scoped, tag = 'input window, operand 0, single buffered']
    #allocation3 [shape = 's32[1]{0}', space=sflag, size = 0x4, scoped, tag = 'scoped memory for tpu_custom_call.1']
    #allocation4 [shape = 's32[1]{0}', space=sflag, size = 0x4, scoped, tag = 'scoped memory for tpu_custom_call.1']
    #allocation5 [shape = 'u8[8192]{0}', space=vmem, size = 0x2000, scoped, tag = 'input window, operand 1, single buffered']
    #allocation6 [shape = 's32[1]{0}', space=sflag, size = 0x4, scoped, tag = 'scoped memory for tpu_custom_call.1']
    #allocation7 [shape = 'u8[8192]{0}', space=vmem, size = 0x2000, scoped, tag = 'input window, operand 2, single buffered']
    #allocation8 [shape = 'u8[2048]{0}', space=vmem, size = 0x800, scoped, tag = 'output window, operand 0, single buffered']
    %8 = vsyncpa [#allocation3], 0
    %9 = vsyncpa [#allocation6], 0
    %10 = vsyncpa [#allocation4], 0
    // Predicated region
    $region2: #{tpu_custom_call.1} parent=1 // pred_check
      _
    $region3: #{tpu_custom_call.1} parent=1 // pred_check_branch
      %12 = sbr.rel (0) target = $region5
    $region4: #{tpu_custom_call.1} parent=1 // pred_region
      %s13 = sadd.s32 0, 0
      %s15 = ssub.s32 256, 256
      %16 = vsyncadd [#allocation3], %s15
      %s17 = smul.addr %s13, 4
      %s18 = smul.addr %s17, 64
      %s19 = scalar_lea.hbm %s0, %s18
      %s21 = sshll.u32 [#allocation2], 4
      %s22 = int_to_ptr.vmem [resolvable:$true] %s21
      %24 = dma.hbm_to_vmem [thread:$0]  %s19, 256, %s22, [#allocation3]
    $region5: #{tpu_custom_call.1} parent=1 // pred_fallthru
      _
    // Predicated region
    $region6: #{tpu_custom_call.1} parent=1 // pred_check
      _
    $region7: #{tpu_custom_call.1} parent=1 // pred_check_branch
      %26 = sbr.rel (0) target = $region9
    $region8: #{tpu_custom_call.1} parent=1 // pred_region
      %s27 = sadd.s32 0, 0
      %s29 = ssub.s32 256, 256
      %30 = vsyncadd [#allocation6], %s29
      %s31 = smul.addr %s27, 4
      %s32 = smul.addr %s31, 64
      %s33 = scalar_lea.hbm %s1, %s32
      %s35 = sshll.u32 [#allocation5], 4
      %s36 = int_to_ptr.vmem [resolvable:$true] %s35
      %38 = dma.hbm_to_vmem [thread:$0]  %s33, 256, %s36, [#allocation6]
    $region9: #{tpu_custom_call.1} parent=1 // pred_fallthru
      _
    // Predicated region
    $region10: #{tpu_custom_call.1} parent=1 // pred_check
      _
    $region11: #{tpu_custom_call.1} parent=1 // pred_check_branch
      %40 = sbr.rel (0) target = $region13
    $region12: #{tpu_custom_call.1} parent=1 // pred_region
      %s41 = sadd.s32 0, 0
      %s43 = ssub.s32 256, 256
      %44 = vsyncadd [#allocation6], %s43
      %s45 = smul.addr %s41, 4
      %s46 = smul.addr %s45, 64
      %s47 = scalar_lea.hbm %s2, %s46
      %s49 = sshll.u32 [#allocation7], 4
      %s50 = int_to_ptr.vmem [resolvable:$true] %s49
      %52 = dma.hbm_to_vmem [thread:$0]  %s47, 256, %s50, [#allocation6]
    $region13: #{tpu_custom_call.1} parent=1 // pred_fallthru
      _
    // Predicated region
    $region14: #{tpu_custom_call.1} parent=1 // pred_check
      _
    $region15: #{tpu_custom_call.1} parent=1 // pred_check_branch
      %54 = sbr.rel (0) target = $region17
    $region16: #{tpu_custom_call.1} parent=1 // pred_region
      %55 = dma.done [#allocation3], 256
    $region17: #{tpu_custom_call.1} parent=1 // pred_fallthru
      _
    // Predicated region
    $region18: #{tpu_custom_call.1} parent=1 // pred_check
      _
    $region19: #{tpu_custom_call.1} parent=1 // pred_check_branch
      %57 = sbr.rel (0) target = $region21
    $region20: #{tpu_custom_call.1} parent=1 // pred_region
      %58 = dma.done [#allocation6], 256
    $region21: #{tpu_custom_call.1} parent=1 // pred_fallthru
      _
    // Predicated region
    $region22: #{tpu_custom_call.1} parent=1 // pred_check
      _
    $region23: #{tpu_custom_call.1} parent=1 // pred_check_branch
      %60 = sbr.rel (0) target = $region25
    $region24: #{tpu_custom_call.1} parent=1 // pred_region
      %61 = dma.done [#allocation6], 256
    $region25: #{tpu_custom_call.1} parent=1 // pred_fallthru
      _
    %s62 = sadd.s32 0, 0
    %s63 = sadd.s32 0, 0
    %s64 = sadd.s32 0, 0
    %p65 = scmp.eq.s32.totalorder 0, 0
    // Predicated region
    $region26: #{tpu_custom_call.1} parent=1 // pred_check
      %p66 = pneg %p65
    $region27: #{tpu_custom_call.1} parent=1 // pred_check_branch
      %68 = sbr.rel (%p66) target = $region29
    $region28: #{tpu_custom_call.1} parent=1 // pred_region
      %v69 = vlaneseq
      %vm70 = vcmp.ge.s32.totalorder %v69, 0
      %vm71 = vcmp.lt.s32.totalorder %v69, 512
      %vm72 = vmand %vm70, %vm71
      %73 = vst.msk [vmem:[#allocation8] sm:$0xf] %vm72, 0.0
    $region29: #{tpu_custom_call.1} parent=1 // pred_fallthru
      _
    %v74 = vld [vmem:[#allocation5] sm:$0xff]
    %v75 = vld [vmem:[#allocation5 + $0x8] sm:$0xff]
    %v76 = vld [vmem:[#allocation2] sm:$0xff]
    %v77 = vld [vmem:[#allocation2 + $0x8] sm:$0xff]
    %v78 = vld [vmem:[#allocation7] sm:$0xff]
    %v79 = vld [vmem:[#allocation7 + $0x8] sm:$0xff]
    %v80 = vsub.f32 %v74, %v76
    %v81 = vsub.f32 %v75, %v77
    %v82 = vsub.f32 %v74, %v78
    %v83 = vsub.f32 %v75, %v79
    %v84 = vmul.f32 %v80, %v80
    %v85 = vmul.f32 %v81, %v81
    %v86 = vmul.f32 %v82, %v82
    %v87 = vmul.f32 %v83, %v83
    %v88 = vsub.f32 %v84, %v86
    %v89 = vsub.f32 %v85, %v87
    %v93 = vunpack.c.l.s4 1966171168
    %v94 = vunpack.c.0.s8 %v93
    %v95 = vlaneseq
    %v96 = vshrl.u32 %v95, 7
    %v97 = vsub.s32 %v94, %v96
    %v98 = vrot.slane %v88, %v97
    %v100 = vunpack.c.l.s4 1966171168
    %v101 = vunpack.c.0.s8 %v100
    %v102 = vlaneseq
    %v103 = vshrl.u32 %v102, 7
    %v104 = vsub.s32 %v101, %v103
    %v105 = vrot.slane %v89, %v104
    %v106 = vcombine.low %v98, %v105
    %v107 = vcombine.high %v98, %v105
    %v109 = vunpack.c.l.s4 1966171168
    %v110 = vunpack.c.0.s8 %v109
    %v111 = vlaneseq
    %v112 = vshrl.u32 %v111, 7
    %v113 = vsub.s32 %v110, %v112
    %v114 = vrot.slane %v106, %v113
    %v116 = vunpack.c.l.s4 1966171168
    %v117 = vunpack.c.0.s8 %v116
    %v118 = vlaneseq
    %v119 = vshrl.u32 %v118, 7
    %v120 = vsub.s32 %v117, %v119
    %v121 = vrot.slane %v107, %v120
    %v122 = vcombine.high %v114, %v114
    %v123 = vcombine.high %v121, %v121
    %v124 = vlaneseq
    %v125 = vshrl.u32 %v124, 7
    %v126 = vsub.s32 0, %v125
    %v127 = vrot.slane %v114, %v126
    %v128 = vlaneseq
    %v129 = vshrl.u32 %v128, 7
    %v130 = vsub.s32 1, %v129
    %v131 = vrot.slane %v114, %v130
    %v132 = vlaneseq
    %v133 = vshrl.u32 %v132, 7
    %v134 = vsub.s32 2, %v133
    %v135 = vrot.slane %v114, %v134
    %v136 = vlaneseq
    %v137 = vshrl.u32 %v136, 7
    %v138 = vsub.s32 3, %v137
    %v139 = vrot.slane %v114, %v138
    %v140 = vlaneseq
    %v141 = vshrl.u32 %v140, 7
    %v142 = vsub.s32 0, %v141
    %v143 = vrot.slane %v121, %v142
    %v144 = vlaneseq
    %v145 = vshrl.u32 %v144, 7
    %v146 = vsub.s32 1, %v145
    %v147 = vrot.slane %v121, %v146
    %v148 = vlaneseq
    %v149 = vshrl.u32 %v148, 7
    %v150 = vsub.s32 2, %v149
    %v151 = vrot.slane %v121, %v150
    %v152 = vlaneseq
    %v153 = vshrl.u32 %v152, 7
    %v154 = vsub.s32 3, %v153
    %v155 = vrot.slane %v121, %v154
    %v156 = vlaneseq
    %v157 = vshrl.u32 %v156, 7
    %v158 = vsub.s32 0, %v157
    %v159 = vrot.slane %v122, %v158
    %v160 = vlaneseq
    %v161 = vshrl.u32 %v160, 7
    %v162 = vsub.s32 1, %v161
    %v163 = vrot.slane %v122, %v162
    %v164 = vlaneseq
    %v165 = vshrl.u32 %v164, 7
    %v166 = vsub.s32 2, %v165
    %v167 = vrot.slane %v122, %v166
    %v168 = vlaneseq
    %v169 = vshrl.u32 %v168, 7
    %v170 = vsub.s32 3, %v169
    %v171 = vrot.slane %v122, %v170
    %v172 = vlaneseq
    %v173 = vshrl.u32 %v172, 7
    %v174 = vsub.s32 0, %v173
    %v175 = vrot.slane %v123, %v174
    %v176 = vlaneseq
    %v177 = vshrl.u32 %v176, 7
    %v178 = vsub.s32 1, %v177
    %v179 = vrot.slane %v123, %v178
    %v180 = vlaneseq
    %v181 = vshrl.u32 %v180, 7
    %v182 = vsub.s32 2, %v181
    %v183 = vrot.slane %v123, %v182
    %v184 = vlaneseq
    %v185 = vshrl.u32 %v184, 7
    %v186 = vsub.s32 3, %v185
    %v187 = vrot.slane %v123, %v186
    %vm204 = vcmask 1040384
    %v205 = vsel %vm204, %v127, 0.0
    %v206 = vsel %vm204, %v143, 0.0
    %v207 = vadd.f32 %v205, %v206
    %v208 = vsel %vm204, %v159, 0.0
    %v209 = vadd.f32 %v207, %v208
    %v210 = vsel %vm204, %v175, 0.0
    %v211 = vadd.f32 %v209, %v210
    %v212 = vsel %vm204, %v131, 0.0
    %v213 = vsel %vm204, %v147, 0.0
    %v214 = vadd.f32 %v212, %v213
    %v215 = vsel %vm204, %v163, 0.0
    %v216 = vadd.f32 %v214, %v215
    %v217 = vsel %vm204, %v179, 0.0
    %v218 = vadd.f32 %v216, %v217
    %v219 = vsel %vm204, %v135, 0.0
    %v220 = vsel %vm204, %v151, 0.0
    %v221 = vadd.f32 %v219, %v220
    %v222 = vsel %vm204, %v167, 0.0
    %v223 = vadd.f32 %v221, %v222
    %v224 = vsel %vm204, %v183, 0.0
    %v225 = vadd.f32 %v223, %v224
    %v226 = vsel %vm204, %v139, 0.0
    %v227 = vsel %vm204, %v155, 0.0
    %v228 = vadd.f32 %v226, %v227
    %v229 = vsel %vm204, %v171, 0.0
    %v230 = vadd.f32 %v228, %v229
    %v231 = vsel %vm204, %v187, 0.0
    %v232 = vadd.f32 %v230, %v231
    %v233 = vadd.f32 %v211, 0.0
    %v234 = vadd.f32 %v218, 0.0
    %v235 = vadd.f32 %v225, 0.0
    %v236 = vadd.f32 %v232, 0.0
    %v237 = vld [vmem:[#allocation8] sm:$0xf]
    %v242 = vcombine.low %v233, %v234
    %v243 = vcombine.low %v235, %v236
    %v245 = vunpack.c.l.s4 1966171168
    %v246 = vunpack.c.0.s8 %v245
    %v247 = vlaneseq
    %v248 = vshrl.u32 %v247, 7
    %v249 = vsub.s32 %v246, %v248
    %v250 = vrot.slane %v242, %v249
    %v252 = vunpack.c.l.s4 1966171168
    %v253 = vunpack.c.0.s8 %v252
    %v254 = vlaneseq
    %v255 = vshrl.u32 %v254, 7
    %v256 = vsub.s32 %v253, %v255
    %v257 = vrot.slane %v243, %v256
    %v258 = vcombine.low %v250, %v257
    %v260 = vunpack.c.l.s4 1966171168
    %v261 = vunpack.c.0.s8 %v260
    %v262 = vlaneseq
    %v263 = vshrl.u32 %v262, 7
    %v264 = vsub.s32 %v261, %v263
    %v265 = vrot.slane %v258, %v264
    %v267 = vadd.f32 %v237, %v265
    %v268 = vlaneseq
    %vm269 = vcmp.ge.s32.totalorder %v268, 0
    %vm270 = vcmp.lt.s32.totalorder %v268, 512
    %vm271 = vmand %vm269, %vm270
    %272 = vst.msk [vmem:[#allocation8] sm:$0xf] %vm271, %v267
    // Predicated region
    $region30: #{tpu_custom_call.1} parent=1 // pred_check
      _
    $region31: #{tpu_custom_call.1} parent=1 // pred_check_branch
      %274 = sbr.rel (0) target = $region33
    $region32: #{tpu_custom_call.1} parent=1 // pred_region
      %s276 = ssub.s32 64, 64
      %277 = vsyncadd [#allocation4], %s276
      %s279 = sshll.u32 [#allocation8], 4
      %s280 = int_to_ptr.vmem [resolvable:$true] %s279
      %282 = dma.vmem_to_hbm [thread:$0]  %s280, 64, %s3, [#allocation4]
    $region33: #{tpu_custom_call.1} parent=1 // pred_fallthru
      _
    // Predicated region
    $region34: #{tpu_custom_call.1} parent=1 // pred_check
      _
    $region35: #{tpu_custom_call.1} parent=1 // pred_check_branch
      %284 = sbr.rel (0) target = $region37
    $region36: #{tpu_custom_call.1} parent=1 // pred_region
      %285 = dma.done [#allocation4], 64
    $region37: #{tpu_custom_call.1} parent=1 // pred_fallthru
      _
    %286 = vsyncpa [#allocation3], 1
    %287 = vsyncpa [#allocation6], 1
    %288 = vsyncpa [#allocation4], 1

</llo_original>
